<compile_context>
chip_gen: v5e
topology: v5e:2x2
jax: 0.10.0
libtpu: 0.0.40
codegen_flags: <defaults>
</compile_context>

<pallas_src>
import jax
import jax.numpy as jnp
from jax.experimental import pallas as pl
from jax.experimental.pallas import tpu as pltpu

LANE = 128      # lane width (batch padding granularity)
TN_MAX = 2048   # max batch columns per grid step (multiple of 128)


def _mlp_kernel(p_ref, x_ref, o_ref):
    """x_ref/o_ref: [2, TN] f32 blocks (feature-major). p_ref: f32[29] in SMEM.

    Parameter layout (PyTorch W is [out, in], stored row-major):
      p[ 0: 6] = W1 (3x2)   p[ 6: 9] = b1
      p[ 9:15] = W2 (2x3)   p[15:17] = b2
      p[17:21] = W3 (2x2)   p[21:23] = b3
      p[23:27] = W4 (2x2)   p[27:29] = b4
    """
    x0 = x_ref[0:1, :]   # [1, TN]
    x1 = x_ref[1:2, :]   # [1, TN]

    # layer 1: 2 -> 3, sigmoid   (scalar-from-SMEM * vector broadcast FMAs)
    h1 = [jax.nn.sigmoid(p_ref[2 * j] * x0 + p_ref[2 * j + 1] * x1 + p_ref[6 + j])
          for j in range(3)]

    # layer 2: 3 -> 2, sigmoid
    h2 = [jax.nn.sigmoid(p_ref[9 + 3 * j] * h1[0]
                         + p_ref[10 + 3 * j] * h1[1]
                         + p_ref[11 + 3 * j] * h1[2]
                         + p_ref[15 + j])
          for j in range(2)]

    # layer 3: 2 -> 2, sigmoid
    h3 = [jax.nn.sigmoid(p_ref[17 + 2 * j] * h2[0]
                         + p_ref[18 + 2 * j] * h2[1]
                         + p_ref[21 + j])
          for j in range(2)]

    # layer 4: 2 -> 2, no activation
    o_ref[0:1, :] = p_ref[23] * h3[0] + p_ref[24] * h3[1] + p_ref[27]
    o_ref[1:2, :] = p_ref[25] * h3[0] + p_ref[26] * h3[1] + p_ref[28]


def _pack_params(params):
    """Flatten all weights/biases (row-major) into a single f32[29] vector."""
    flat = []
    for name in ("layer_1", "layer_2", "layer_3", "layer_4"):
        w, b = params[name]
        flat.append(jnp.asarray(w, jnp.float32).reshape(-1))
        flat.append(jnp.asarray(b, jnp.float32).reshape(-1))
    return jnp.concatenate(flat)


@jax.jit
def mlp_forward(x, params):
    """x: [N, 2] float32. params: dict name -> (weight [out,in], bias [out])."""
    n, f_in = x.shape
    assert f_in == 2
    p_flat = _pack_params(params)   # f32[29] -> SMEM

    # Feature-major, lane-dense layout: [2, n_pad], batch on the lane axis.
    n_lanes = ((n + LANE - 1) // LANE) * LANE
    tn = n_lanes if n_lanes <= TN_MAX else TN_MAX
    n_pad = ((n + tn - 1) // tn) * tn

    x_fm = jnp.zeros((2, n_pad), jnp.float32)
    x_fm = x_fm.at[:, :n].set(x.astype(jnp.float32).T)

    grid = (n_pad // tn,)
    out_fm = pl.pallas_call(
        _mlp_kernel,
        out_shape=jax.ShapeDtypeStruct((2, n_pad), jnp.float32),
        grid_spec=pltpu.PrefetchScalarGridSpec(
            num_scalar_prefetch=0,
            grid=grid,
            in_specs=[
                # all 29 params as scalars in SMEM (no tiling)
                pl.BlockSpec(memory_space=pltpu.MemorySpace.SMEM),
                # x tile: [2, tn], sublane dim == full array dim (legal)
                pl.BlockSpec((2, tn), lambda i: (0, i)),
            ],
            out_specs=pl.BlockSpec((2, tn), lambda i: (0, i)),
        ),
        compiler_params=pltpu.CompilerParams(
            dimension_semantics=("parallel",)),
    )(p_flat, x_fm)

    # Padded batch columns carry garbage (sigmoid(b) chains); slice them off.
    return out_fm[:, :n].T


def make_params(key):
    """Deterministic init matching nn.Linear default U(-1/sqrt(fan_in), +)."""
    shapes = {
        "layer_1": (3, 2),
        "layer_2": (2, 3),
        "layer_3": (2, 2),
        "layer_4": (2, 2),
    }
    params = {}
    for name, (out_f, in_f) in shapes.items():
        key, kw, kb = jax.random.split(key, 3)
        bound = 1.0 / jnp.sqrt(jnp.float32(in_f))
        w = jax.random.uniform(kw, (out_f, in_f), jnp.float32, -bound, bound)
        b = jax.random.uniform(kb, (out_f,), jnp.float32, -bound, bound)
        params[name] = (w, b)
    return params


def reference_forward(x, params):
    h = x
    for i, name in enumerate(("layer_1", "layer_2", "layer_3", "layer_4")):
        w, b = params[name]
        h = h @ w.T + b
        if i < 3:
            h = jax.nn.sigmoid(h)
    return h


# TODO(synk): predict()'s log_softmax/argmax is host-side post-processing of
# forward(); it is intentionally not implemented as a kernel.

if __name__ == "__main__":
    key = jax.random.PRNGKey(0)
    kx, kp, kx2 = jax.random.split(key, 3)
    params = make_params(kp)

    # moons-style small batch: [8, 2]
    x_small = jax.random.normal(kx, (8, 2), dtype=jnp.float32)
    out_small = jax.block_until_ready(mlp_forward(x_small, params))
    ref_small = reference_forward(x_small, params)
    assert out_small.shape == (8, 2)
    assert jnp.allclose(out_small, ref_small, atol=1e-5, rtol=1e-5), (
        out_small, ref_small)

    # larger batch exercising the multi-tile grid + lane-padding path
    x_big = jax.random.normal(kx2, (4196, 2), dtype=jnp.float32)
    out_big = jax.block_until_ready(mlp_forward(x_big, params))
    ref_big = reference_forward(x_big, params)
    assert out_big.shape == (4196, 2)
    assert jnp.allclose(out_big, ref_big, atol=1e-5, rtol=1e-5)

    print("KERNEL_OK")
</pallas_src>

<mosaic_0001>
module attributes {stable_mosaic.version = 11 : i64} {
  func.func @_mlp_kernel(%arg0: i32, %arg1: memref<29xf32, #tpu.memory_space<smem>>, %arg2: memref<2x128xf32, #tpu.memory_space<vmem>>, %arg3: memref<2x128xf32, #tpu.memory_space<vmem>>) attributes {dimension_semantics = [#tpu.dimension_semantics<parallel>], iteration_bounds = array<i64: 1>, scalar_prefetch = 0 : i64, scratch_operands = 0 : i64, tpu.core_type = #tpu.core_type<tc>, window_params = [{transform_indices = @transform_0, window_bounds = array<i64: 29>}, {transform_indices = @transform_1, window_bounds = array<i64: 2, 128>}, {transform_indices = @transform_2, window_bounds = array<i64: 2, 128>}]} {
    %c0 = arith.constant 0 : index
    %c0_0 = arith.constant 0 : index
    %0 = vector.load %arg2[%c0, %c0_0] : memref<2x128xf32, #tpu.memory_space<vmem>>, vector<1x128xf32>
    %c1 = arith.constant 1 : index
    %c0_1 = arith.constant 0 : index
    %1 = vector.load %arg2[%c1, %c0_1] : memref<2x128xf32, #tpu.memory_space<vmem>>, vector<1x128xf32>
    %c0_2 = arith.constant 0 : index
    %2 = memref.load %arg1[%c0_2] : memref<29xf32, #tpu.memory_space<smem>>
    %3 = vector.broadcast %2 : f32 to vector<1x128xf32>
    %4 = arith.mulf %3, %0 : vector<1x128xf32>
    %c1_3 = arith.constant 1 : index
    %5 = memref.load %arg1[%c1_3] : memref<29xf32, #tpu.memory_space<smem>>
    %6 = vector.broadcast %5 : f32 to vector<1x128xf32>
    %7 = arith.mulf %6, %1 : vector<1x128xf32>
    %8 = arith.addf %4, %7 : vector<1x128xf32>
    %c6 = arith.constant 6 : index
    %9 = memref.load %arg1[%c6] : memref<29xf32, #tpu.memory_space<smem>>
    %10 = vector.broadcast %9 : f32 to vector<1x128xf32>
    %11 = arith.addf %8, %10 : vector<1x128xf32>
    %12 = arith.negf %11 : vector<1x128xf32>
    %13 = math.exp %12 : vector<1x128xf32>
    %cst = arith.constant 1.000000e+00 : f32
    %14 = vector.broadcast %cst : f32 to vector<1x128xf32>
    %15 = arith.addf %14, %13 : vector<1x128xf32>
    %16 = arith.divf %14, %15 : vector<1x128xf32>
    %c2 = arith.constant 2 : index
    %17 = memref.load %arg1[%c2] : memref<29xf32, #tpu.memory_space<smem>>
    %18 = vector.broadcast %17 : f32 to vector<1x128xf32>
    %19 = arith.mulf %18, %0 : vector<1x128xf32>
    %c3 = arith.constant 3 : index
    %20 = memref.load %arg1[%c3] : memref<29xf32, #tpu.memory_space<smem>>
    %21 = vector.broadcast %20 : f32 to vector<1x128xf32>
    %22 = arith.mulf %21, %1 : vector<1x128xf32>
    %23 = arith.addf %19, %22 : vector<1x128xf32>
    %c7 = arith.constant 7 : index
    %24 = memref.load %arg1[%c7] : memref<29xf32, #tpu.memory_space<smem>>
    %25 = vector.broadcast %24 : f32 to vector<1x128xf32>
    %26 = arith.addf %23, %25 : vector<1x128xf32>
    %27 = arith.negf %26 : vector<1x128xf32>
    %28 = math.exp %27 : vector<1x128xf32>
    %cst_4 = arith.constant 1.000000e+00 : f32
    %29 = vector.broadcast %cst_4 : f32 to vector<1x128xf32>
    %30 = arith.addf %29, %28 : vector<1x128xf32>
    %31 = arith.divf %29, %30 : vector<1x128xf32>
    %c4 = arith.constant 4 : index
    %32 = memref.load %arg1[%c4] : memref<29xf32, #tpu.memory_space<smem>>
    %33 = vector.broadcast %32 : f32 to vector<1x128xf32>
    %34 = arith.mulf %33, %0 : vector<1x128xf32>
    %c5 = arith.constant 5 : index
    %35 = memref.load %arg1[%c5] : memref<29xf32, #tpu.memory_space<smem>>
    %36 = vector.broadcast %35 : f32 to vector<1x128xf32>
    %37 = arith.mulf %36, %1 : vector<1x128xf32>
    %38 = arith.addf %34, %37 : vector<1x128xf32>
    %c8 = arith.constant 8 : index
    %39 = memref.load %arg1[%c8] : memref<29xf32, #tpu.memory_space<smem>>
    %40 = vector.broadcast %39 : f32 to vector<1x128xf32>
    %41 = arith.addf %38, %40 : vector<1x128xf32>
    %42 = arith.negf %41 : vector<1x128xf32>
    %43 = math.exp %42 : vector<1x128xf32>
    %cst_5 = arith.constant 1.000000e+00 : f32
    %44 = vector.broadcast %cst_5 : f32 to vector<1x128xf32>
    %45 = arith.addf %44, %43 : vector<1x128xf32>
    %46 = arith.divf %44, %45 : vector<1x128xf32>
    %c9 = arith.constant 9 : index
    %47 = memref.load %arg1[%c9] : memref<29xf32, #tpu.memory_space<smem>>
    %48 = vector.broadcast %47 : f32 to vector<1x128xf32>
    %49 = arith.mulf %48, %16 : vector<1x128xf32>
    %c10 = arith.constant 10 : index
    %50 = memref.load %arg1[%c10] : memref<29xf32, #tpu.memory_space<smem>>
    %51 = vector.broadcast %50 : f32 to vector<1x128xf32>
    %52 = arith.mulf %51, %31 : vector<1x128xf32>
    %53 = arith.addf %49, %52 : vector<1x128xf32>
    %c11 = arith.constant 11 : index
    %54 = memref.load %arg1[%c11] : memref<29xf32, #tpu.memory_space<smem>>
    %55 = vector.broadcast %54 : f32 to vector<1x128xf32>
    %56 = arith.mulf %55, %46 : vector<1x128xf32>
    %57 = arith.addf %53, %56 : vector<1x128xf32>
    %c15 = arith.constant 15 : index
    %58 = memref.load %arg1[%c15] : memref<29xf32, #tpu.memory_space<smem>>
    %59 = vector.broadcast %58 : f32 to vector<1x128xf32>
    %60 = arith.addf %57, %59 : vector<1x128xf32>
    %61 = arith.negf %60 : vector<1x128xf32>
    %62 = math.exp %61 : vector<1x128xf32>
    %cst_6 = arith.constant 1.000000e+00 : f32
    %63 = vector.broadcast %cst_6 : f32 to vector<1x128xf32>
    %64 = arith.addf %63, %62 : vector<1x128xf32>
    %65 = arith.divf %63, %64 : vector<1x128xf32>
    %c12 = arith.constant 12 : index
    %66 = memref.load %arg1[%c12] : memref<29xf32, #tpu.memory_space<smem>>
    %67 = vector.broadcast %66 : f32 to vector<1x128xf32>
    %68 = arith.mulf %67, %16 : vector<1x128xf32>
    %c13 = arith.constant 13 : index
    %69 = memref.load %arg1[%c13] : memref<29xf32, #tpu.memory_space<smem>>
    %70 = vector.broadcast %69 : f32 to vector<1x128xf32>
    %71 = arith.mulf %70, %31 : vector<1x128xf32>
    %72 = arith.addf %68, %71 : vector<1x128xf32>
    %c14 = arith.constant 14 : index
    %73 = memref.load %arg1[%c14] : memref<29xf32, #tpu.memory_space<smem>>
    %74 = vector.broadcast %73 : f32 to vector<1x128xf32>
    %75 = arith.mulf %74, %46 : vector<1x128xf32>
    %76 = arith.addf %72, %75 : vector<1x128xf32>
    %c16 = arith.constant 16 : index
    %77 = memref.load %arg1[%c16] : memref<29xf32, #tpu.memory_space<smem>>
    %78 = vector.broadcast %77 : f32 to vector<1x128xf32>
    %79 = arith.addf %76, %78 : vector<1x128xf32>
    %80 = arith.negf %79 : vector<1x128xf32>
    %81 = math.exp %80 : vector<1x128xf32>
    %cst_7 = arith.constant 1.000000e+00 : f32
    %82 = vector.broadcast %cst_7 : f32 to vector<1x128xf32>
    %83 = arith.addf %82, %81 : vector<1x128xf32>
    %84 = arith.divf %82, %83 : vector<1x128xf32>
    %c17 = arith.constant 17 : index
    %85 = memref.load %arg1[%c17] : memref<29xf32, #tpu.memory_space<smem>>
    %86 = vector.broadcast %85 : f32 to vector<1x128xf32>
    %87 = arith.mulf %86, %65 : vector<1x128xf32>
    %c18 = arith.constant 18 : index
    %88 = memref.load %arg1[%c18] : memref<29xf32, #tpu.memory_space<smem>>
    %89 = vector.broadcast %88 : f32 to vector<1x128xf32>
    %90 = arith.mulf %89, %84 : vector<1x128xf32>
    %91 = arith.addf %87, %90 : vector<1x128xf32>
    %c21 = arith.constant 21 : index
    %92 = memref.load %arg1[%c21] : memref<29xf32, #tpu.memory_space<smem>>
    %93 = vector.broadcast %92 : f32 to vector<1x128xf32>
    %94 = arith.addf %91, %93 : vector<1x128xf32>
    %95 = arith.negf %94 : vector<1x128xf32>
    %96 = math.exp %95 : vector<1x128xf32>
    %cst_8 = arith.constant 1.000000e+00 : f32
    %97 = vector.broadcast %cst_8 : f32 to vector<1x128xf32>
    %98 = arith.addf %97, %96 : vector<1x128xf32>
    %99 = arith.divf %97, %98 : vector<1x128xf32>
    %c19 = arith.constant 19 : index
    %100 = memref.load %arg1[%c19] : memref<29xf32, #tpu.memory_space<smem>>
    %101 = vector.broadcast %100 : f32 to vector<1x128xf32>
    %102 = arith.mulf %101, %65 : vector<1x128xf32>
    %c20 = arith.constant 20 : index
    %103 = memref.load %arg1[%c20] : memref<29xf32, #tpu.memory_space<smem>>
    %104 = vector.broadcast %103 : f32 to vector<1x128xf32>
    %105 = arith.mulf %104, %84 : vector<1x128xf32>
    %106 = arith.addf %102, %105 : vector<1x128xf32>
    %c22 = arith.constant 22 : index
    %107 = memref.load %arg1[%c22] : memref<29xf32, #tpu.memory_space<smem>>
    %108 = vector.broadcast %107 : f32 to vector<1x128xf32>
    %109 = arith.addf %106, %108 : vector<1x128xf32>
    %110 = arith.negf %109 : vector<1x128xf32>
    %111 = math.exp %110 : vector<1x128xf32>
    %cst_9 = arith.constant 1.000000e+00 : f32
    %112 = vector.broadcast %cst_9 : f32 to vector<1x128xf32>
    %113 = arith.addf %112, %111 : vector<1x128xf32>
    %114 = arith.divf %112, %113 : vector<1x128xf32>
    %c23 = arith.constant 23 : index
    %115 = memref.load %arg1[%c23] : memref<29xf32, #tpu.memory_space<smem>>
    %116 = vector.broadcast %115 : f32 to vector<1x128xf32>
    %117 = arith.mulf %116, %99 : vector<1x128xf32>
    %c24 = arith.constant 24 : index
    %118 = memref.load %arg1[%c24] : memref<29xf32, #tpu.memory_space<smem>>
    %119 = vector.broadcast %118 : f32 to vector<1x128xf32>
    %120 = arith.mulf %119, %114 : vector<1x128xf32>
    %121 = arith.addf %117, %120 : vector<1x128xf32>
    %c27 = arith.constant 27 : index
    %122 = memref.load %arg1[%c27] : memref<29xf32, #tpu.memory_space<smem>>
    %123 = vector.broadcast %122 : f32 to vector<1x128xf32>
    %124 = arith.addf %121, %123 : vector<1x128xf32>
    %c0_10 = arith.constant 0 : index
    %c0_11 = arith.constant 0 : index
    %125 = vector.load %arg3[%c0_10, %c0_11] : memref<2x128xf32, #tpu.memory_space<vmem>>, vector<1x128xf32>
    tpu.vector_store %arg3[%c0_10, %c0_11], %124 {strides = array<i32>} : memref<2x128xf32, #tpu.memory_space<vmem>>, vector<1x128xf32>,
    %c25 = arith.constant 25 : index
    %126 = memref.load %arg1[%c25] : memref<29xf32, #tpu.memory_space<smem>>
    %127 = vector.broadcast %126 : f32 to vector<1x128xf32>
    %128 = arith.mulf %127, %99 : vector<1x128xf32>
    %c26 = arith.constant 26 : index
    %129 = memref.load %arg1[%c26] : memref<29xf32, #tpu.memory_space<smem>>
    %130 = vector.broadcast %129 : f32 to vector<1x128xf32>
    %131 = arith.mulf %130, %114 : vector<1x128xf32>
    %132 = arith.addf %128, %131 : vector<1x128xf32>
    %c28 = arith.constant 28 : index
    %133 = memref.load %arg1[%c28] : memref<29xf32, #tpu.memory_space<smem>>
    %134 = vector.broadcast %133 : f32 to vector<1x128xf32>
    %135 = arith.addf %132, %134 : vector<1x128xf32>
    %c1_12 = arith.constant 1 : index
    %c0_13 = arith.constant 0 : index
    %136 = vector.load %arg3[%c1_12, %c0_13] : memref<2x128xf32, #tpu.memory_space<vmem>>, vector<1x128xf32>
    tpu.vector_store %arg3[%c1_12, %c0_13], %135 {strides = array<i32>} : memref<2x128xf32, #tpu.memory_space<vmem>>, vector<1x128xf32>,
    return
  }
  func.func @transform_0(%arg0: i32) -> i32 {
    %c0_i32 = arith.constant 0 : i32
    %c0_i32_0 = arith.constant 0 : i32
    return %c0_i32 : i32
  }
  func.func @transform_1(%arg0: i32) -> (i32, i32) {
    %c0_i32 = arith.constant 0 : i32
    %c0_i32_0 = arith.constant 0 : i32
    return %c0_i32, %arg0 : i32, i32
  }
  func.func @transform_2(%arg0: i32) -> (i32, i32) {
    %c0_i32 = arith.constant 0 : i32
    %c0_i32_0 = arith.constant 0 : i32
    return %c0_i32, %arg0 : i32, i32
  }
}

</mosaic_0001>

<llo_original>
// kernel: mlp_forward.1
$region0: #{mlp_forward.1}
  #allocation0 [shape = 'u32[]', space=smem, size = 0x4, offset = 0x4, fixed_abs, tag = 'smem constant byte address 0x4 - core index']
  #allocation1 [shape = 'u32[72,128]{1,0:T(1,128)}', space=vmem, size = 0x9000, scoped, tag = 'internal scratch']
  %s0 = inlined_call_operand.vmem [shape: f32[29], index: 0, kind: input, shape index: {}]
  %s1 = inlined_call_operand.vmem [shape: f32[2,128], index: 1, kind: input, shape index: {}]
  %s2 = inlined_call_operand.vmem [shape: f32[2,128], index: 2, kind: output, shape index: {}]
  %s3 = sld [smem:[#allocation0]]
  $region22: #{mlp_forward.1} parent=0
    _
  %s5 = ssub.s32 1, %s3
  %s6 = scalar_select 0, %s5, %s3
  $region1: #{mlp_forward.1} parent=0
    #allocation2 [shape = 'u8[512]{0}', space=smem, size = 0x200, scoped, tag = 'input window, operand 0, single buffered']
    #allocation3 [shape = 's32[1]{0}', space=sflag, size = 0x4, scoped, tag = 'scoped memory for mlp_forward.1']
    %7 = vsyncpa [#allocation3], 0
    // Predicated region
    $region2: #{mlp_forward.1} parent=1 // pred_check
      _
    $region3: #{mlp_forward.1} parent=1 // pred_check_branch
      %9 = sbr.rel (0) target = $region5
    $region4: #{mlp_forward.1} parent=1 // pred_region
      %11 = vsyncadd [#allocation3], 0
      %s13 = sshll.u32 %s0, 4
      %s14 = int_to_ptr.vmem [resolvable:$true] %s13
      %16 = dma.vmem_to_smem %s14, 16, [#allocation2], [#allocation3]
    $region5: #{mlp_forward.1} parent=1 // pred_fallthru
      _
    // Predicated region
    $region6: #{mlp_forward.1} parent=1 // pred_check
      _
    $region7: #{mlp_forward.1} parent=1 // pred_check_branch
      %18 = sbr.rel (0) target = $region9
    $region8: #{mlp_forward.1} parent=1 // pred_region
      _
    $region9: #{mlp_forward.1} parent=1 // pred_fallthru
      _
    // Predicated region
    $region10: #{mlp_forward.1} parent=1 // pred_check
      _
    $region11: #{mlp_forward.1} parent=1 // pred_check_branch
      %20 = sbr.rel (0) target = $region13
    $region12: #{mlp_forward.1} parent=1 // pred_region
      %22 = dma.done [#allocation3], 16
    $region13: #{mlp_forward.1} parent=1 // pred_fallthru
      _
    %23 = sfence
    %v24 = vld [vmem:[%s1] sm:$0x1]
    %v25 = vld [vmem:[%s1 + $0x1] sm:$0x1]
    %s26 = sld [smem:[#allocation2]]
    %v27 = vstv %s26
    %v28 = vmul.f32 %v27, %v24
    %s29 = sld [smem:[#allocation2 + $0x1]]
    %v30 = vstv %s29
    %v31 = vmul.f32 %v30, %v25
    %v32 = vadd.f32 %v28, %v31
    %s33 = sld [smem:[#allocation2 + $0x6]]
    %v34 = vstv %s33
    %v35 = vadd.f32 %v32, %v34
    %v36 = vxor.u32 %v35, 2147483648
    %v37 = vmul.f32 %v36, 1.442695
    %v38 = vpow.pop %v37
    %v39 = vadd.f32 %v38, 1.0
    %v40 = vrcp.pop %v39
    %v41 = vmul.f32 %v39, %v40
    %v42 = vsub.f32 1.0, %v41
    %v43 = vmul.f32 %v40, %v42
    %v44 = vadd.f32 %v40, %v43
    %vm45 = vweird.f32 %v39
    %vm46 = vweird.f32 %v40
    %vm47 = vmor %vm45, %vm46
    %v48 = vsel %vm47, %v40, %v44
    %v49 = vand.u32 2147483647, %v39
    %vm50 = vcmp.eq.f32.partialorder %v49, 8.507059e+37
    %v51 = vand.u32 %v39, 2147483648
    %v52 = vor.u32 1.1754944e-38, %v51
    %v53 = vsel %vm50, %v52, %v48
    %v54 = vmul.f32 1.0, %v53
    %s55 = sld [smem:[#allocation2 + $0x2]]
    %v56 = vstv %s55
    %v57 = vmul.f32 %v56, %v24
    %s58 = sld [smem:[#allocation2 + $0x3]]
    %v59 = vstv %s58
    %v60 = vmul.f32 %v59, %v25
    %v61 = vadd.f32 %v57, %v60
    %s62 = sld [smem:[#allocation2 + $0x7]]
    %v63 = vstv %s62
    %v64 = vadd.f32 %v61, %v63
    %v65 = vxor.u32 %v64, 2147483648
    %v66 = vmul.f32 %v65, 1.442695
    %v67 = vpow.pop %v66
    %v68 = vadd.f32 %v67, 1.0
    %v69 = vrcp.pop %v68
    %v70 = vmul.f32 %v68, %v69
    %v71 = vsub.f32 1.0, %v70
    %v72 = vmul.f32 %v69, %v71
    %v73 = vadd.f32 %v69, %v72
    %vm74 = vweird.f32 %v68
    %vm75 = vweird.f32 %v69
    %vm76 = vmor %vm74, %vm75
    %v77 = vsel %vm76, %v69, %v73
    %v78 = vand.u32 2147483647, %v68
    %vm79 = vcmp.eq.f32.partialorder %v78, 8.507059e+37
    %v80 = vand.u32 %v68, 2147483648
    %v81 = vor.u32 1.1754944e-38, %v80
    %v82 = vsel %vm79, %v81, %v77
    %v83 = vmul.f32 1.0, %v82
    %s84 = sld [smem:[#allocation2 + $0x4]]
    %v85 = vstv %s84
    %v86 = vmul.f32 %v85, %v24
    %s87 = sld [smem:[#allocation2 + $0x5]]
    %v88 = vstv %s87
    %v89 = vmul.f32 %v88, %v25
    %v90 = vadd.f32 %v86, %v89
    %s91 = sld [smem:[#allocation2 + $0x8]]
    %v92 = vstv %s91
    %v93 = vadd.f32 %v90, %v92
    %v94 = vxor.u32 %v93, 2147483648
    %v95 = vmul.f32 %v94, 1.442695
    %v96 = vpow.pop %v95
    %v97 = vadd.f32 %v96, 1.0
    %v98 = vrcp.pop %v97
    %v99 = vmul.f32 %v97, %v98
    %v100 = vsub.f32 1.0, %v99
    %v101 = vmul.f32 %v98, %v100
    %v102 = vadd.f32 %v98, %v101
    %vm103 = vweird.f32 %v97
    %vm104 = vweird.f32 %v98
    %vm105 = vmor %vm103, %vm104
    %v106 = vsel %vm105, %v98, %v102
    %v107 = vand.u32 2147483647, %v97
    %vm108 = vcmp.eq.f32.partialorder %v107, 8.507059e+37
    %v109 = vand.u32 %v97, 2147483648
    %v110 = vor.u32 1.1754944e-38, %v109
    %v111 = vsel %vm108, %v110, %v106
    %v112 = vmul.f32 1.0, %v111
    %s113 = sld [smem:[#allocation2 + $0x9]]
    %v114 = vstv %s113
    %v115 = vmul.f32 %v114, %v54
    %s116 = sld [smem:[#allocation2 + $0xa]]
    %v117 = vstv %s116
    %v118 = vmul.f32 %v117, %v83
    %v119 = vadd.f32 %v115, %v118
    %s120 = sld [smem:[#allocation2 + $0xb]]
    %v121 = vstv %s120
    %v122 = vmul.f32 %v121, %v112
    %v123 = vadd.f32 %v119, %v122
    %s124 = sld [smem:[#allocation2 + $0xf]]
    %v125 = vstv %s124
    %v126 = vadd.f32 %v123, %v125
    %v127 = vxor.u32 %v126, 2147483648
    %v128 = vmul.f32 %v127, 1.442695
    %v129 = vpow.pop %v128
    %v130 = vadd.f32 %v129, 1.0
    %v131 = vrcp.pop %v130
    %v132 = vmul.f32 %v130, %v131
    %v133 = vsub.f32 1.0, %v132
    %v134 = vmul.f32 %v131, %v133
    %v135 = vadd.f32 %v131, %v134
    %vm136 = vweird.f32 %v130
    %vm137 = vweird.f32 %v131
    %vm138 = vmor %vm136, %vm137
    %v139 = vsel %vm138, %v131, %v135
    %v140 = vand.u32 2147483647, %v130
    %vm141 = vcmp.eq.f32.partialorder %v140, 8.507059e+37
    %v142 = vand.u32 %v130, 2147483648
    %v143 = vor.u32 1.1754944e-38, %v142
    %v144 = vsel %vm141, %v143, %v139
    %v145 = vmul.f32 1.0, %v144
    %s146 = sld [smem:[#allocation2 + $0xc]]
    %v147 = vstv %s146
    %v148 = vmul.f32 %v147, %v54
    %s149 = sld [smem:[#allocation2 + $0xd]]
    %v150 = vstv %s149
    %v151 = vmul.f32 %v150, %v83
    %v152 = vadd.f32 %v148, %v151
    %s153 = sld [smem:[#allocation2 + $0xe]]
    %v154 = vstv %s153
    %v155 = vmul.f32 %v154, %v112
    %v156 = vadd.f32 %v152, %v155
    %s157 = sld [smem:[#allocation2 + $0x10]]
    %v158 = vstv %s157
    %v159 = vadd.f32 %v156, %v158
    %v160 = vxor.u32 %v159, 2147483648
    %v161 = vmul.f32 %v160, 1.442695
    %v162 = vpow.pop %v161
    %v163 = vadd.f32 %v162, 1.0
    %v164 = vrcp.pop %v163
    %v165 = vmul.f32 %v163, %v164
    %v166 = vsub.f32 1.0, %v165
    %v167 = vmul.f32 %v164, %v166
    %v168 = vadd.f32 %v164, %v167
    %vm169 = vweird.f32 %v163
    %vm170 = vweird.f32 %v164
    %vm171 = vmor %vm169, %vm170
    %v172 = vsel %vm171, %v164, %v168
    %v173 = vand.u32 2147483647, %v163
    %vm174 = vcmp.eq.f32.partialorder %v173, 8.507059e+37
    %v175 = vand.u32 %v163, 2147483648
    %v176 = vor.u32 1.1754944e-38, %v175
    %v177 = vsel %vm174, %v176, %v172
    %v178 = vmul.f32 1.0, %v177
    %s179 = sld [smem:[#allocation2 + $0x11]]
    %v180 = vstv %s179
    %v181 = vmul.f32 %v180, %v145
    %s182 = sld [smem:[#allocation2 + $0x12]]
    %v183 = vstv %s182
    %v184 = vmul.f32 %v183, %v178
    %v185 = vadd.f32 %v181, %v184
    %s186 = sld [smem:[#allocation2 + $0x15]]
    %v187 = vstv %s186
    %v188 = vadd.f32 %v185, %v187
    %v189 = vxor.u32 %v188, 2147483648
    %v190 = vmul.f32 %v189, 1.442695
    %v191 = vpow.pop %v190
    %v192 = vadd.f32 %v191, 1.0
    %v193 = vrcp.pop %v192
    %v194 = vmul.f32 %v192, %v193
    %v195 = vsub.f32 1.0, %v194
    %v196 = vmul.f32 %v193, %v195
    %v197 = vadd.f32 %v193, %v196
    %vm198 = vweird.f32 %v192
    %vm199 = vweird.f32 %v193
    %vm200 = vmor %vm198, %vm199
    %v201 = vsel %vm200, %v193, %v197
    %v202 = vand.u32 2147483647, %v192
    %vm203 = vcmp.eq.f32.partialorder %v202, 8.507059e+37
    %v204 = vand.u32 %v192, 2147483648
    %v205 = vor.u32 1.1754944e-38, %v204
    %v206 = vsel %vm203, %v205, %v201
    %v207 = vmul.f32 1.0, %v206
    %s208 = sld [smem:[#allocation2 + $0x13]]
    %v209 = vstv %s208
    %v210 = vmul.f32 %v209, %v145
    %s211 = sld [smem:[#allocation2 + $0x14]]
    %v212 = vstv %s211
    %v213 = vmul.f32 %v212, %v178
    %v214 = vadd.f32 %v210, %v213
    %s215 = sld [smem:[#allocation2 + $0x16]]
    %v216 = vstv %s215
    %v217 = vadd.f32 %v214, %v216
    %v218 = vxor.u32 %v217, 2147483648
    %v219 = vmul.f32 %v218, 1.442695
    %v220 = vpow.pop %v219
    %v221 = vadd.f32 %v220, 1.0
    %v222 = vrcp.pop %v221
    %v223 = vmul.f32 %v221, %v222
    %v224 = vsub.f32 1.0, %v223
    %v225 = vmul.f32 %v222, %v224
    %v226 = vadd.f32 %v222, %v225
    %vm227 = vweird.f32 %v221
    %vm228 = vweird.f32 %v222
    %vm229 = vmor %vm227, %vm228
    %v230 = vsel %vm229, %v222, %v226
    %v231 = vand.u32 2147483647, %v221
    %vm232 = vcmp.eq.f32.partialorder %v231, 8.507059e+37
    %v233 = vand.u32 %v221, 2147483648
    %v234 = vor.u32 1.1754944e-38, %v233
    %v235 = vsel %vm232, %v234, %v230
    %v236 = vmul.f32 1.0, %v235
    %s237 = sld [smem:[#allocation2 + $0x17]]
    %v238 = vstv %s237
    %v239 = vmul.f32 %v238, %v207
    %s240 = sld [smem:[#allocation2 + $0x18]]
    %v241 = vstv %s240
    %v242 = vmul.f32 %v241, %v236
    %v243 = vadd.f32 %v239, %v242
    %s244 = sld [smem:[#allocation2 + $0x1b]]
    %v245 = vstv %s244
    %v246 = vadd.f32 %v243, %v245
    %247 = vst [vmem:[%s2] sm:$0x1] %v246
    %s248 = sld [smem:[#allocation2 + $0x19]]
    %v249 = vstv %s248
    %v250 = vmul.f32 %v249, %v207
    %s251 = sld [smem:[#allocation2 + $0x1a]]
    %v252 = vstv %s251
    %v253 = vmul.f32 %v252, %v236
    %v254 = vadd.f32 %v250, %v253
    %s255 = sld [smem:[#allocation2 + $0x1c]]
    %v256 = vstv %s255
    %v257 = vadd.f32 %v254, %v256
    %258 = vst [vmem:[%s2 + $0x1] sm:$0x1] %v257
    // Predicated region
    $region14: #{mlp_forward.1} parent=1 // pred_check
      _
    $region15: #{mlp_forward.1} parent=1 // pred_check_branch
      %260 = sbr.rel (0) target = $region17
    $region16: #{mlp_forward.1} parent=1 // pred_region
      _
    $region17: #{mlp_forward.1} parent=1 // pred_fallthru
      _
    // Predicated region
    $region18: #{mlp_forward.1} parent=1 // pred_check
      _
    $region19: #{mlp_forward.1} parent=1 // pred_check_branch
      %262 = sbr.rel (0) target = $region21
    $region20: #{mlp_forward.1} parent=1 // pred_region
      _
    $region21: #{mlp_forward.1} parent=1 // pred_fallthru
      _
    %263 = vsyncpa [#allocation3], 1

</llo_original>
